<compile_context>
chip_gen: v5e
topology: v5e:2x2
jax: 0.10.0
libtpu: 0.0.40
codegen_flags: <defaults>
</compile_context>

<pallas_src>
import functools

import jax
import jax.numpy as jnp
from jax.experimental import pallas as pl
from jax.experimental.pallas import tpu as pltpu


def _chomp_kernel(x_ref, o_ref, *, w_out):
    # x_ref: (TR, H*W) tile, o_ref: (TR, H_out*W) tile.
    # Chomp == copy the leading w_out lanes of every row (static prefix slice).
    o_ref[...] = x_ref[:, :w_out]


def chomp_t_forward(x, chomp_t, *, vmem_budget_bytes=8 * 1024 * 1024):
    """Pallas Chomp_T: returns x[:, :, :-chomp_t, :] for NCHW x."""
    assert chomp_t > 0, "chomp_t must be positive"
    N, C, H, W = x.shape
    H_out = H - chomp_t
    assert H_out > 0, "chomp_t must be smaller than the H (time) dimension"

    R = N * C                 # one row per (n, c) plane
    in_cols = H * W           # lane width of the input rows
    out_cols = H_out * W      # lane width of the output rows (lane-dense output)

    # Free reshape (row-major): x[n, c, h, w] -> x2[n*C + c, h*W + w]
    x2 = x.reshape(R, in_cols)

    # Row tile TR sized so double-buffered (input + output) tiles fit the VMEM
    # budget (kept conservative so it is safe even on v5e's 16 MiB default and
    # v7x's 64 MiB physical VMEM).
    dsize = jnp.dtype(x.dtype).itemsize
    bytes_per_row = (in_cols + out_cols) * dsize * 2      # x tile + out tile, 2x buffered
    tr_cap = max(1, vmem_budget_bytes // max(1, bytes_per_row))
    if R <= tr_cap:
        TR = R                                            # full sublane extent -> always legal
    else:
        TR = max(8, (min(tr_cap, R) // 8) * 8)            # multiple of 8 for (8,128) layout

    grid = (pl.cdiv(R, TR),)

    out2 = pl.pallas_call(
        functools.partial(_chomp_kernel, w_out=out_cols),
        out_shape=jax.ShapeDtypeStruct((R, out_cols), x.dtype),
        grid=grid,
        in_specs=[pl.BlockSpec((TR, in_cols), lambda i: (i, 0))],
        out_specs=pl.BlockSpec((TR, out_cols), lambda i: (i, 0)),
        compiler_params=pltpu.CompilerParams(
            dimension_semantics=("parallel",)),   # megacore: shard row tiles across TCs
    )(x2)

    return out2.reshape(N, C, H_out, W)


def _ref_forward(x, chomp_t):
    return x[:, :, :-chomp_t, :]


if __name__ == "__main__":
    key = jax.random.PRNGKey(0)
    k1, k2 = jax.random.split(key)

    # Config 1: shapes consistent with the module's use (NCHW feature map).
    x1 = jax.random.normal(k1, (2, 4, 16, 16), jnp.float32)
    y1 = chomp_t_forward(x1, chomp_t=2)
    jax.block_until_ready(y1)
    assert y1.shape == (2, 4, 14, 16)
    assert jnp.array_equal(y1, _ref_forward(x1, 2))

    # Config 2: odd sizes (rows not a multiple of 8, lanes not a multiple of 128).
    x2 = jax.random.normal(k2, (3, 5, 20, 12), jnp.float32)
    y2 = chomp_t_forward(x2, chomp_t=3)
    jax.block_until_ready(y2)
    assert y2.shape == (3, 5, 17, 12)
    assert jnp.array_equal(y2, _ref_forward(x2, 3))

    print("KERNEL_OK")
</pallas_src>

<mosaic_0001>
module attributes {stable_mosaic.version = 11 : i64} {
  func.func @_chomp_kernel(%arg0: i32, %arg1: memref<8x256xf32, #tpu.memory_space<vmem>>, %arg2: memref<8x224xf32, #tpu.memory_space<vmem>>) attributes {dimension_semantics = [#tpu.dimension_semantics<parallel>], iteration_bounds = array<i64: 1>, scalar_prefetch = 0 : i64, scratch_operands = 0 : i64, tpu.core_type = #tpu.core_type<tc>, window_params = [{transform_indices = @transform_0, window_bounds = array<i64: 8, 256>}, {transform_indices = @transform_1, window_bounds = array<i64: 8, 224>}]} {
    %c0 = arith.constant 0 : index
    %c0_0 = arith.constant 0 : index
    %0 = vector.load %arg1[%c0, %c0_0] : memref<8x256xf32, #tpu.memory_space<vmem>>, vector<8x224xf32>
    %c0_1 = arith.constant 0 : index
    %c0_2 = arith.constant 0 : index
    %1 = vector.load %arg2[%c0_1, %c0_2] : memref<8x224xf32, #tpu.memory_space<vmem>>, vector<8x224xf32>
    tpu.vector_store %arg2[%c0_1, %c0_2], %0 {strides = array<i32>} : memref<8x224xf32, #tpu.memory_space<vmem>>, vector<8x224xf32>,
    return
  }
  func.func @transform_0(%arg0: i32) -> (i32, i32) {
    %c0_i32 = arith.constant 0 : i32
    %c0_i32_0 = arith.constant 0 : i32
    return %arg0, %c0_i32 : i32, i32
  }
  func.func @transform_1(%arg0: i32) -> (i32, i32) {
    %c0_i32 = arith.constant 0 : i32
    %c0_i32_0 = arith.constant 0 : i32
    return %arg0, %c0_i32 : i32, i32
  }
}

</mosaic_0001>

<llo_original>
// kernel: tpu_custom_call.1
$region0: #{tpu_custom_call.1}
  #allocation0 [shape = 'u32[]', space=smem, size = 0x4, offset = 0x4, fixed_abs, tag = 'smem constant byte address 0x4 - core index']
  #allocation1 [shape = 'u32[72,128]{1,0:T(1,128)}', space=vmem, size = 0x9000, scoped, tag = 'internal scratch']
  %s0 = inlined_call_operand.hbm [shape: f32[8,256], index: 0, kind: input, shape index: {}]
  %s1 = inlined_call_operand.hbm [shape: f32[8,224], index: 1, kind: output, shape index: {}]
  %s2 = sld [smem:[#allocation0]]
  $region18: #{tpu_custom_call.1} parent=0
    _
  %s4 = ssub.s32 1, %s2
  %s5 = scalar_select 0, %s4, %s2
  $region1: #{tpu_custom_call.1} parent=0
    #allocation2 [shape = 'u8[8192]{0}', space=vmem, size = 0x2000, scoped, tag = 'input window, operand 0, single buffered']
    #allocation3 [shape = 's32[1]{0}', space=sflag, size = 0x4, scoped, tag = 'scoped memory for tpu_custom_call.1']
    #allocation4 [shape = 's32[1]{0}', space=sflag, size = 0x4, scoped, tag = 'scoped memory for tpu_custom_call.1']
    #allocation5 [shape = 'u8[8192]{0}', space=vmem, size = 0x2000, scoped, tag = 'output window, operand 0, single buffered']
    %6 = vsyncpa [#allocation3], 0
    %7 = vsyncpa [#allocation4], 0
    // Predicated region
    $region2: #{tpu_custom_call.1} parent=1 // pred_check
      _
    $region3: #{tpu_custom_call.1} parent=1 // pred_check_branch
      %9 = sbr.rel (0) target = $region5
    $region4: #{tpu_custom_call.1} parent=1 // pred_region
      %11 = vsyncadd [#allocation3], 0
      %s13 = sshll.u32 %s0, 4
      %s14 = int_to_ptr.hbm [resolvable:$true] %s13
      %s15 = sshll.u32 [#allocation2], 4
      %s16 = int_to_ptr.vmem [resolvable:$true] %s15
      %18 = dma.hbm_to_vmem [thread:$0]  %s14, 256, %s16, [#allocation3]
    $region5: #{tpu_custom_call.1} parent=1 // pred_fallthru
      _
    // Predicated region
    $region6: #{tpu_custom_call.1} parent=1 // pred_check
      _
    $region7: #{tpu_custom_call.1} parent=1 // pred_check_branch
      %20 = sbr.rel (0) target = $region9
    $region8: #{tpu_custom_call.1} parent=1 // pred_region
      %22 = dma.done [#allocation3], 256
    $region9: #{tpu_custom_call.1} parent=1 // pred_fallthru
      _
    %v23 = vld [vmem:[#allocation2] sm:$0xff]
    %v24 = vld [vmem:[#allocation2 + $0x8] sm:$0xff]
    %25 = vst [vmem:[#allocation5] sm:$0xff] %v23
    %vm26 = vcmask 785408
    %27 = vst.msk [vmem:[#allocation5 + $0x8] sm:$0xff] %vm26, %v24
    // Predicated region
    $region10: #{tpu_custom_call.1} parent=1 // pred_check
      _
    $region11: #{tpu_custom_call.1} parent=1 // pred_check_branch
      %29 = sbr.rel (0) target = $region13
    $region12: #{tpu_custom_call.1} parent=1 // pred_region
      %31 = vsyncadd [#allocation4], 0
      %s33 = sshll.u32 [#allocation5], 4
      %s34 = int_to_ptr.vmem [resolvable:$true] %s33
      %s35 = sshll.u32 %s1, 4
      %s36 = int_to_ptr.hbm [resolvable:$true] %s35
      %38 = dma.vmem_to_hbm [thread:$0]  %s34, 256, %s36, [#allocation4]
    $region13: #{tpu_custom_call.1} parent=1 // pred_fallthru
      _
    // Predicated region
    $region14: #{tpu_custom_call.1} parent=1 // pred_check
      _
    $region15: #{tpu_custom_call.1} parent=1 // pred_check_branch
      %40 = sbr.rel (0) target = $region17
    $region16: #{tpu_custom_call.1} parent=1 // pred_region
      %42 = dma.done [#allocation4], 256
    $region17: #{tpu_custom_call.1} parent=1 // pred_fallthru
      _
    %43 = vsyncpa [#allocation3], 1
    %44 = vsyncpa [#allocation4], 1

</llo_original>
